<compile_context>
chip_gen: v7x
topology: tpu7x:2x2x1
jax: 0.10.0
libtpu: 0.0.40
codegen_flags: <defaults>
</compile_context>

<pallas_src>
import functools

import jax
import jax.numpy as jnp
from jax.experimental import pallas as pl
from jax.experimental.pallas import tpu as pltpu


def _round_up(x, m):
    return ((x + m - 1) // m) * m


def _lora_kernel(x_ref, a_ref, b_ref, o_ref, t_ref, *, alpha):
    # x_ref: (tile_b, in_dim)   VMEM
    # a_ref: (in_dim, r_p)      VMEM (constant block across the whole grid)
    # b_ref: (r_p, tile_n)      VMEM (constant across the batch axis)
    # o_ref: (tile_b, tile_n)   VMEM
    # t_ref: (tile_b, r_p) f32  VMEM scratch, persists across grid steps.
    #
    # The inner grid axis (axis 1) walks out_dim tiles while the batch tile is
    # fixed, so the dominant matmul x @ A is computed once per batch tile and
    # reused for every out tile.  alpha is folded into the tiny rank-r
    # intermediate rather than the wide output tile.
    @pl.when(pl.program_id(1) == 0)
    def _():
        t_ref[...] = alpha * jnp.dot(
            x_ref[...], a_ref[...], preferred_element_type=jnp.float32
        )

    o_ref[...] = jnp.dot(
        t_ref[...], b_ref[...], preferred_element_type=jnp.float32
    ).astype(o_ref.dtype)


def _vmem_caps():
    """(tile budget bytes, vmem_limit_bytes) derived from the chip's VMEM."""
    try:
        phys = int(getattr(pltpu.get_tpu_info(), "vmem_capacity_bytes"))
    except Exception:
        phys = 64 * 1024 * 1024  # conservative (v7x-sized) fallback
    # Leave headroom for Mosaic's internal scratch / alignment slop.
    limit = min(phys - 8 * 1024 * 1024, int(phys * 0.85))
    budget = limit - 4 * 1024 * 1024
    return budget, limit


def _choose_tiles(batch, in_dim, out_dim, r_p, budget_bytes, bytes_per_el):
    """Pick (tile_b, tile_n) sized to the VMEM budget, avoiding x/out padding."""

    def max_tile_b(tile_n):
        # Double-buffered x and out tiles + double-buffered lane-padded lora_A
        # block + double-buffered lora_B block + the rank-r scratch (lane
        # padded to 128).
        fixed = 2 * in_dim * max(r_p, 128) * bytes_per_el          # lora_A
        fixed += 2 * max(r_p, 8) * tile_n * bytes_per_el           # lora_B
        per_row = bytes_per_el * (2 * in_dim + 2 * tile_n) + 4 * max(r_p, 128)
        tb = (budget_bytes - fixed) // per_row
        return int(max(8, min(tb, 1024)))  # 1024-row cap: HBM-roofline sweet spot

    # tile_n: prefer the full out_features (lane-dense stores, no out padding,
    # single inner step, lora_B never re-DMA'd).  Shrink only if a full-width
    # out tile would starve tile_b.
    tile_n = out_dim
    if out_dim > 128 and max_tile_b(out_dim) < min(batch, 256):
        if out_dim % 128 == 0:
            tile_n = 128
            for cand in range(out_dim - 128, 0, -128):
                if out_dim % cand == 0 and max_tile_b(cand) >= min(batch, 256):
                    tile_n = cand
                    break
        else:
            # Ragged huge out_dim: pad (fallback; costs an extra output pass).
            tile_n = min(_round_up(out_dim, 128), 2048)
    cap = max_tile_b(tile_n)

    # tile_b: a divisor of batch (multiple of 8) so x / out need no padding,
    # and <= batch // 2 so the "parallel" batch axis has >= 2 steps to feed
    # v7x's two TensorCores (harmless ~0.35 us extra step on 1-TC parts).
    if batch % 8 == 0:
        upper = min(cap, batch)
        if batch >= 16:
            upper = min(upper, batch // 2)
        tile_b = 8
        for cand in range((upper // 8) * 8, 0, -8):
            if batch % cand == 0:
                tile_b = cand
                break
    elif batch <= cap:
        tile_b = batch              # full-dim block: no (8,128) constraint, no pad
    else:
        tile_b = (cap // 8) * 8     # fallback: wrapper pads the batch

    return tile_b, tile_n


def lora_stack_forward(x, lora_A, lora_B, lora_alpha):
    """alpha * (x @ lora_A @ lora_B) computed in a Pallas TPU kernel."""
    batch, in_dim = x.shape
    in_dim_a, r_eff = lora_A.shape
    r_eff_b, out_dim = lora_B.shape
    assert in_dim == in_dim_a and r_eff == r_eff_b

    budget, vmem_limit = _vmem_caps()
    r_p = max(8, _round_up(r_eff, 8))
    tile_b, tile_n = _choose_tiles(
        batch, in_dim, out_dim, r_p, budget, jnp.dtype(x.dtype).itemsize
    )

    # Padding of x / the output is avoided by the tile chooser in the common
    # case; it only kicks in for ragged shapes that don't fit one tile.
    batch_p = _round_up(batch, tile_b)
    out_p = _round_up(out_dim, tile_n)

    x_p = x if batch_p == batch else jnp.pad(x, ((0, batch_p - batch), (0, 0)))
    # A / B rank padding is exact (padded columns/rows contribute zeros) and
    # touches only tiny (in_dim, r) / (r, out) arrays.
    a_p = jnp.pad(lora_A, ((0, 0), (0, r_p - r_eff)))
    b_p = jnp.pad(lora_B, ((0, r_p - r_eff), (0, out_p - out_dim)))

    grid = (batch_p // tile_b, out_p // tile_n)  # out axis inner: x never re-DMA'd
    kernel = functools.partial(_lora_kernel, alpha=float(lora_alpha))

    out = pl.pallas_call(
        kernel,
        out_shape=jax.ShapeDtypeStruct((batch_p, out_p), x.dtype),
        grid_spec=pltpu.PrefetchScalarGridSpec(
            num_scalar_prefetch=0,
            grid=grid,
            in_specs=[
                # x: tiled over batch, full in_features; block index constant
                # across the inner out axis.
                pl.BlockSpec((tile_b, in_dim), lambda i, j: (i, 0)),
                # lora_A: full (tiny) matrix, resident across the whole grid.
                pl.BlockSpec((in_dim, r_p), lambda i, j: (0, 0)),
                # lora_B: tiled along out_features only.
                pl.BlockSpec((r_p, tile_n), lambda i, j: (0, j)),
            ],
            out_specs=pl.BlockSpec((tile_b, tile_n), lambda i, j: (i, j)),
            scratch_shapes=[pltpu.VMEM((tile_b, r_p), jnp.float32)],
        ),
        compiler_params=pltpu.CompilerParams(
            # Batch axis shards across TensorCores; out axis must be
            # "arbitrary" so the hoisted x@A scratch persists across it.
            dimension_semantics=("parallel", "arbitrary"),
            vmem_limit_bytes=vmem_limit,
        ),
    )(x_p, a_p, b_p)

    if batch_p != batch or out_p != out_dim:
        out = out[:batch, :out_dim]
    return out


def build_lora_params(key, in_dim, out_dim, num_tasks, curr_task, r):
    """Deterministic parameters mirroring LoRAStack.__init__/add_task/set_curr_task.

    Each add_task creates A_i ~ N(0,1) * (1/sqrt(r)) of shape (in_dim, 1) and
    B_i of shape (1, out_dim).  set_curr_task concatenates tasks 0..curr_task.
    NOTE: the nn.Module initializes B_i to zeros (untrained); here we fill B_i
    with deterministic random values so the kernel output is non-trivially
    checkable.
    """
    std_dev = 1.0 / jnp.sqrt(jnp.float32(r))
    keys = jax.random.split(key, 2 * num_tasks)
    lora_As = [
        jax.random.normal(keys[2 * i], (in_dim, 1), dtype=jnp.float32) * std_dev
        for i in range(num_tasks)
    ]
    lora_Bs = [
        0.05 * jax.random.normal(keys[2 * i + 1], (1, out_dim), dtype=jnp.float32)
        for i in range(num_tasks)
    ]
    r_eff = curr_task + 1
    lora_A = jnp.concatenate(lora_As[:r_eff], axis=1)  # (in_dim, r_eff)
    lora_B = jnp.concatenate(lora_Bs[:r_eff], axis=0)  # (r_eff, out_dim)
    return lora_A, lora_B


if __name__ == "__main__":
    key = jax.random.PRNGKey(0)
    k_x, k_p = jax.random.split(key)

    # Small shapes consistent with the module: x is (batch, in_features).
    batch, in_dim, out_dim = 16, 32, 64
    num_tasks, curr_task = 3, 2          # -> r_eff = 3 (rank-1 per task, stacked)
    lora_r, lora_alpha = 4, 8.0          # config.lora.r, config.lora.lora_alpha

    x = jax.random.normal(k_x, (batch, in_dim), dtype=jnp.float32)
    lora_A, lora_B = build_lora_params(k_p, in_dim, out_dim, num_tasks, curr_task, lora_r)

    out = lora_stack_forward(x, lora_A, lora_B, lora_alpha)
    out = jax.block_until_ready(out)

    # Pure-JAX reference check of forward semantics.
    ref = lora_alpha * (x @ lora_A @ lora_B)
    assert out.shape == (batch, out_dim)
    assert jnp.allclose(out, ref, atol=1e-4, rtol=1e-4), "mismatch vs reference"

    print("KERNEL_OK")
</pallas_src>

<mosaic_0001>
module attributes {stable_mosaic.version = 11 : i64} {
  func.func @_lora_kernel(%arg0: i32, %arg1: i32, %arg2: memref<8x32xf32, #tpu.memory_space<vmem>>, %arg3: memref<32x8xf32, #tpu.memory_space<vmem>>, %arg4: memref<8x64xf32, #tpu.memory_space<vmem>>, %arg5: memref<8x64xf32, #tpu.memory_space<vmem>>, %arg6: memref<8x8xf32, #tpu.memory_space<vmem>>) attributes {dimension_semantics = [#tpu.dimension_semantics<parallel>, #tpu.dimension_semantics<arbitrary>], iteration_bounds = array<i64: 2, 1>, scalar_prefetch = 0 : i64, scratch_operands = 1 : i64, tpu.core_type = #tpu.core_type<tc>, window_params = [{transform_indices = @transform_0, window_bounds = array<i64: 8, 32>}, {pipeline_mode = #tpu.pipeline_mode<synchronous>, transform_indices = @transform_1, window_bounds = array<i64: 32, 8>}, {transform_indices = @transform_2, window_bounds = array<i64: 8, 64>}, {transform_indices = @transform_3, window_bounds = array<i64: 8, 64>}]} {
    %c0_i32 = arith.constant 0 : i32
    %0 = arith.cmpi eq, %arg1, %c0_i32 : i32
    %1 = arith.extui %0 : i1 to i32
    %c0_i32_0 = arith.constant 0 : i32
    %2 = arith.cmpi ne, %1, %c0_i32_0 : i32
    scf.if %2 {
      %c0_6 = arith.constant 0 : index
      %c0_7 = arith.constant 0 : index
      %7 = vector.load %arg2[%c0_6, %c0_7] : memref<8x32xf32, #tpu.memory_space<vmem>>, vector<8x32xf32>
      %c0_8 = arith.constant 0 : index
      %c0_9 = arith.constant 0 : index
      %8 = vector.load %arg3[%c0_8, %c0_9] : memref<32x8xf32, #tpu.memory_space<vmem>>, vector<32x8xf32>
      %cst_10 = arith.constant dense<0.000000e+00> : vector<8x8xf32>
      %9 = tpu.matmul %7, %8, %cst_10 {dimension_numbers = #tpu.dot_dimension_numbers<[1], [0], [0], [1], [0, 0, 1, 1], [], []>} : vector<8x32xf32>, vector<32x8xf32>, vector<8x8xf32> -> vector<8x8xf32>
      %cst_11 = arith.constant 8.000000e+00 : f32
      %10 = vector.broadcast %cst_11 : f32 to vector<8x8xf32>
      %11 = arith.mulf %10, %9 : vector<8x8xf32>
      %c0_12 = arith.constant 0 : index
      %c0_13 = arith.constant 0 : index
      %12 = vector.load %arg6[%c0_12, %c0_13] : memref<8x8xf32, #tpu.memory_space<vmem>>, vector<8x8xf32>
      tpu.vector_store %arg6[%c0_12, %c0_13], %11 {strides = array<i32>} : memref<8x8xf32, #tpu.memory_space<vmem>>, vector<8x8xf32>,
    } else {
    }
    %c0 = arith.constant 0 : index
    %c0_1 = arith.constant 0 : index
    %3 = vector.load %arg6[%c0, %c0_1] : memref<8x8xf32, #tpu.memory_space<vmem>>, vector<8x8xf32>
    %c0_2 = arith.constant 0 : index
    %c0_3 = arith.constant 0 : index
    %4 = vector.load %arg4[%c0_2, %c0_3] : memref<8x64xf32, #tpu.memory_space<vmem>>, vector<8x64xf32>
    %cst = arith.constant dense<0.000000e+00> : vector<8x64xf32>
    %5 = tpu.matmul %3, %4, %cst {dimension_numbers = #tpu.dot_dimension_numbers<[1], [0], [0], [1], [0, 0, 1, 1], [], []>} : vector<8x8xf32>, vector<8x64xf32>, vector<8x64xf32> -> vector<8x64xf32>
    %c0_4 = arith.constant 0 : index
    %c0_5 = arith.constant 0 : index
    %6 = vector.load %arg5[%c0_4, %c0_5] : memref<8x64xf32, #tpu.memory_space<vmem>>, vector<8x64xf32>
    tpu.vector_store %arg5[%c0_4, %c0_5], %5 {strides = array<i32>} : memref<8x64xf32, #tpu.memory_space<vmem>>, vector<8x64xf32>,
    return
  }
  func.func @transform_0(%arg0: i32, %arg1: i32) -> (i32, i32) {
    %c0_i32 = arith.constant 0 : i32
    %c0_i32_0 = arith.constant 0 : i32
    return %arg0, %c0_i32 : i32, i32
  }
  func.func @transform_1(%arg0: i32, %arg1: i32) -> (i32, i32) {
    %c0_i32 = arith.constant 0 : i32
    %c0_i32_0 = arith.constant 0 : i32
    %c0_i32_1 = arith.constant 0 : i32
    return %c0_i32, %c0_i32_0 : i32, i32
  }
  func.func @transform_2(%arg0: i32, %arg1: i32) -> (i32, i32) {
    %c0_i32 = arith.constant 0 : i32
    %c0_i32_0 = arith.constant 0 : i32
    return %c0_i32, %arg1 : i32, i32
  }
  func.func @transform_3(%arg0: i32, %arg1: i32) -> (i32, i32) {
    %c0_i32 = arith.constant 0 : i32
    return %arg0, %arg1 : i32, i32
  }
}

</mosaic_0001>

<llo_original>
// kernel: tpu_custom_call.1
$region0: #{tpu_custom_call.1}
  #allocation0 [shape = 'u32[]', space=smem, size = 0x4, offset = 0x4, fixed_abs, tag = 'smem constant byte address 0x4 - core index']
  #allocation1 [shape = 'u32[144,128]{1,0:T(1,128)}', space=vmem, size = 0x12000, scoped, tag = 'internal scratch']
  #allocation2 [shape = 'f32[8,8]{1,0:T(8,128)}', space=vmem, size = 0x1000, scoped, tag = 'scratch operand']
  %s0 = inlined_call_operand.vmem [shape: f32[16,32], index: 0, kind: input, shape index: {}]
  %s1 = inlined_call_operand.vmem [shape: f32[32,8], index: 1, kind: input, shape index: {}]
  %s2 = inlined_call_operand.vmem [shape: f32[8,64], index: 2, kind: input, shape index: {}]
  %s3 = inlined_call_operand.hbm [shape: f32[16,64], index: 3, kind: output, shape index: {}]
  %s4 = sld [smem:[#allocation0]]
  $region49: #{tpu_custom_call.1} parent=0
    _
  %s6 = ssub.s32 1, %s4
  %s7 = scalar_select 0, %s6, %s4
  $region1: #{tpu_custom_call.1} parent=0
    #allocation3 [shape = 'u8[8192]{0}', space=vmem, size = 0x2000, scoped, tag = 'output window, operand 0']
    #allocation4 [shape = 's32[2]{0}', space=sflag, size = 0x8, scoped, tag = 'scoped memory for tpu_custom_call.1']
    %8 = vsyncpa [#allocation4], 0
    %s9 = scalar_lea.sflag [#allocation4], 1
    %10 = vsyncpa %s9, 0
    loop: start=0, step=1, limit=4
    $region2: #{tpu_custom_call.1} parent=1 // loop_pre_header
      _
    $region3: #{tpu_custom_call.1} parent=1 // loop_header
      %s12 = sphi 0, %s16
      %p13 = scmp.ge.s32.totalorder %s12, 4
      %s19 = sphi 0, %s31
      %s20 = sphi 0, %s27
      %s21 = sphi 0, %s19
      %s22 = sphi 0, %s20
      %s23 = sphi 0, %s21
      %s24 = sphi 0, %s22
      %s34 = sphi 0, %s36
      %s37 = sphi 0, %s34
      %s38 = sphi 0, %s37
      %s54 = sphi 0, %s38
      %s58 = sphi 0, %s58
      %s60 = sphi 0, %s58
      %s61 = sphi 0, %s60
      %s75 = sphi 0, %s61
      %s81 = sphi 0, %s83
      %s84 = sphi 0, %s81
      %s85 = sphi 0, %s84
      %s101 = sphi 0, %s85
      %s109 = sphi 0, %s111
      %s112 = sphi 0, %s109
      %s113 = sphi 0, %s112
      %s129 = sphi 0, %s113
    $region4: #{tpu_custom_call.1} parent=1 // loop_header_branch
      %15 = sbr.rel (%p13) target = $region8
    $region5: #{tpu_custom_call.1} parent=1 // loop_body
      %s17 = ssub.s32 %s12, 1
      %s18 = ssub.s32 %s12, 2
      %s25 = sadd.s32 1, %s20
      %p26 = scmp.ge.s32.totalorder %s25, 1
      %s27 = scalar_select %p26, 0, %s25
      %s28 = sadd.s32 1, %s19
      %s29 = scalar_select %p26, %s28, %s19
      %p30 = scmp.ge.s32.totalorder %s29, 2
      %s31 = scalar_select %p30, 0, %s29
      %s32 = ssub.s32 %s19, %s31
      %p33 = scmp.eq.s32.totalorder %s32, 0
      %s35 = sadd.s32 %s34, 1
      %s36 = scalar_select %p33, %s34, %s35
      %p39 = pneg %p33
      %p40 = scmp.eq.s32.totalorder %s12, 1
      %p41 = por %p39, %p40
      %p42 = scmp.ne.s32.totalorder %s34, %s37
      %p43 = scmp.eq.s32.totalorder %s12, 0
      %p44 = por %p42, %p43
      %p45 = scmp.ne.s32.totalorder %s34, %s37
      %p46 = scmp.eq.s32.totalorder %s17, 1
      %p47 = por %p45, %p46
      %p48 = scmp.ne.s32.totalorder %s37, %s38
      %p49 = scmp.eq.s32.totalorder %s17, 0
      %p50 = por %p48, %p49
      %p51 = scmp.ne.s32.totalorder %s37, %s38
      %p52 = scmp.eq.s32.totalorder %s18, 1
      %p53 = por %p51, %p52
      %p55 = scmp.ne.s32.totalorder %s38, %s54
      %p56 = scmp.eq.s32.totalorder %s18, 0
      %p57 = por %p55, %p56
      %s59 = sadd.s32 %s58, 1
      %p62 = scmp.eq.s32.totalorder %s12, 1
      %p63 = scmp.ne.s32.totalorder %s58, %s60
      %p64 = scmp.eq.s32.totalorder %s12, 0
      %p65 = por %p63, %p64
      %p66 = scmp.ne.s32.totalorder %s58, %s60
      %p67 = scmp.eq.s32.totalorder %s17, 1
      %p68 = por %p66, %p67
      %p69 = scmp.ne.s32.totalorder %s60, %s61
      %p70 = scmp.eq.s32.totalorder %s17, 0
      %p71 = por %p69, %p70
      %p72 = scmp.ne.s32.totalorder %s60, %s61
      %p73 = scmp.eq.s32.totalorder %s18, 1
      %p74 = por %p72, %p73
      %p76 = scmp.ne.s32.totalorder %s61, %s75
      %p77 = scmp.eq.s32.totalorder %s18, 0
      %p78 = por %p76, %p77
      %s79 = ssub.s32 %s20, %s27
      %p80 = scmp.eq.s32.totalorder %s79, 0
      %s82 = sadd.s32 %s81, 1
      %s83 = scalar_select %p80, %s81, %s82
      %p86 = pneg %p80
      %p87 = scmp.eq.s32.totalorder %s12, 1
      %p88 = por %p86, %p87
      %p89 = scmp.ne.s32.totalorder %s81, %s84
      %p90 = scmp.eq.s32.totalorder %s12, 0
      %p91 = por %p89, %p90
      %p92 = scmp.ne.s32.totalorder %s81, %s84
      %p93 = scmp.eq.s32.totalorder %s17, 1
      %p94 = por %p92, %p93
      %p95 = scmp.ne.s32.totalorder %s84, %s85
      %p96 = scmp.eq.s32.totalorder %s17, 0
      %p97 = por %p95, %p96
      %p98 = scmp.ne.s32.totalorder %s84, %s85
      %p99 = scmp.eq.s32.totalorder %s18, 1
      %p100 = por %p98, %p99
      %p102 = scmp.ne.s32.totalorder %s85, %s101
      %p103 = scmp.eq.s32.totalorder %s18, 0
      %p104 = por %p102, %p103
      %s105 = ssub.s32 %s19, %s31
      %s106 = ssub.s32 %s20, %s27
      %s107 = sor.u32 %s105, %s106
      %p108 = scmp.eq.s32.totalorder %s107, 0
      %s110 = sadd.s32 %s109, 1
      %s111 = scalar_select %p108, %s109, %s110
      %p114 = pneg %p108
      %p115 = scmp.eq.s32.totalorder %s12, 1
      %p116 = por %p114, %p115
      %p117 = scmp.ne.s32.totalorder %s109, %s112
      %p118 = scmp.eq.s32.totalorder %s12, 0
      %p119 = por %p117, %p118
      %p120 = scmp.ne.s32.totalorder %s109, %s112
      %p121 = scmp.eq.s32.totalorder %s17, 1
      %p122 = por %p120, %p121
      %p123 = scmp.ne.s32.totalorder %s112, %s113
      %p124 = scmp.eq.s32.totalorder %s17, 0
      %p125 = por %p123, %p124
      %p126 = scmp.ne.s32.totalorder %s112, %s113
      %p127 = scmp.eq.s32.totalorder %s18, 1
      %p128 = por %p126, %p127
      %p130 = scmp.ne.s32.totalorder %s113, %s129
      %p131 = scmp.eq.s32.totalorder %s18, 0
      %p132 = por %p130, %p131
      %p133 = scmp.le.s32.totalorder 1, %s12
      %p134 = scmp.lt.s32.totalorder %s12, 3
      %p135 = pnand %p133, %p134
      %p136 = pneg %p135
      // Predicated region
      $region9: #{tpu_custom_call.1} parent=5 // pred_check
        _
      $region10: #{tpu_custom_call.1} parent=5 // pred_check_branch
        %138 = sbr.rel (%p135) target = $region12
      $region11: #{tpu_custom_call.1} parent=5 // pred_region
        %s139 = ssub.s32 %s12, 1
        // Predicated region
        $region13: #{tpu_custom_call.1} parent=11 // pred_check
          %p140 = pneg %p71
        $region14: #{tpu_custom_call.1} parent=11 // pred_check_branch
          %142 = sbr.rel (%p140) target = $region16
        $region15: #{tpu_custom_call.1} parent=11 // pred_region
          _
        $region16: #{tpu_custom_call.1} parent=11 // pred_fallthru
          _
        // Predicated region
        $region17: #{tpu_custom_call.1} parent=11 // pred_check
          %p143 = pneg %p97
        $region18: #{tpu_custom_call.1} parent=11 // pred_check_branch
          %145 = sbr.rel (%p143) target = $region20
        $region19: #{tpu_custom_call.1} parent=11 // pred_region
          %p146 = scmp.lt.s32.totalorder %s22, 0
          %s147 = scalar_select %p146, %s22, 0
          %s148 = smul.addr %s147, 8
          %s149 = scalar_lea.vmem %s2, %s148
        $region20: #{tpu_custom_call.1} parent=11 // pred_fallthru
          _
      $region12: #{tpu_custom_call.1} parent=5 // pred_fallthru
        _
      %p150 = scmp.lt.s32.totalorder %s12, 2
      // Predicated region
      $region21: #{tpu_custom_call.1} parent=5 // pred_check
        %p151 = pneg %p150
      $region22: #{tpu_custom_call.1} parent=5 // pred_check_branch
        %153 = sbr.rel (%p151) target = $region24
      $region23: #{tpu_custom_call.1} parent=5 // pred_region
        // Predicated region
        $region25: #{tpu_custom_call.1} parent=23 // pred_check
          %p154 = pneg %p44
        $region26: #{tpu_custom_call.1} parent=23 // pred_check_branch
          %156 = sbr.rel (%p154) target = $region28
        $region27: #{tpu_custom_call.1} parent=23 // pred_region
          %p157 = scmp.lt.s32.totalorder %s19, 1
          %s158 = scalar_select %p157, %s19, 1
          %s159 = smul.addr %s158, 8
          %s160 = scalar_lea.vmem %s0, %s159
        $region28: #{tpu_custom_call.1} parent=23 // pred_fallthru
          _
      $region24: #{tpu_custom_call.1} parent=5 // pred_fallthru
        _
      %p161 = scmp.le.s32.totalorder 1, %s12
      %p162 = scmp.lt.s32.totalorder %s12, 3
      %p163 = pnand %p161, %p162
      %p164 = pneg %p163
      // Predicated region
      $region29: #{tpu_custom_call.1} parent=5 // pred_check
        _
      $region30: #{tpu_custom_call.1} parent=5 // pred_check_branch
        %166 = sbr.rel (%p163) target = $region32
      $region31: #{tpu_custom_call.1} parent=5 // pred_region
        %s167 = ssub.s32 %s12, 1
        %p168 = scmp.lt.s32.totalorder %s21, 1
        %s169 = scalar_select %p168, %s21, 1
        %s170 = smul.addr %s169, 8
        %s171 = scalar_lea.vmem %s0, %s170
        %p172 = pneg %p50
        %p173 = pneg %p47
        %p174 = pneg %p71
        %p175 = pneg %p68
        %p176 = scmp.lt.s32.totalorder %s22, 0
        %s177 = scalar_select %p176, %s22, 0
        %s178 = smul.addr %s177, 8
        %s179 = scalar_lea.vmem %s2, %s178
        %p180 = pneg %p97
        %p181 = pneg %p94
        %p182 = pneg %p125
        %p183 = pneg %p122
        %s184 = sand.u32 %s112, 1
        %s185 = scalar_lea.sflag [#allocation4], %s184
        %s186 = sand.u32 %s112, 1
        %s187 = smul.addr %s186, 8
        %s188 = scalar_lea.vmem [#allocation3], %s187
        %p189 = scmp.lt.s32.totalorder %s21, 1
        %s190 = scalar_select %p189, %s21, 1
        %s191 = smul.addr %s190, 8
        %s192 = scalar_lea.vmem %s0, %s191
        %p193 = scmp.lt.s32.totalorder %s22, 0
        %s194 = scalar_select %p193, %s22, 0
        %s195 = smul.addr %s194, 8
        %s196 = scalar_lea.vmem %s2, %s195
        %p197 = scmp.eq.s32.totalorder %s22, 0
        // Predicated region
        $region33: #{tpu_custom_call.1} parent=31 // pred_check
          %p198 = pneg %p197
        $region34: #{tpu_custom_call.1} parent=31 // pred_check_branch
          %200 = sbr.rel (%p198) target = $region36
        $region35: #{tpu_custom_call.1} parent=31 // pred_region
          %v201 = vld [vmem:[%s192] sm:$0xff]
          %v202 = vld [vmem:[%s1] sm:$0xff]
          %v203 = vld [vmem:[%s1 + $0x8] sm:$0xff]
          %v204 = vld [vmem:[%s1 + $0x10] sm:$0xff]
          %v205 = vld [vmem:[%s1 + $0x18] sm:$0xff]
          %vm206 = vcmask 261120
          %v208 = vsel %vm206, %v201, 0
          %210 = vmatprep.subr.mxu0 0.0
          %211 = vmatpush1.msra.mxu0 %v202
          %212 = vmatprep.subr.mxu0 0.0
          %213 = vmatpush1.msra.mxu0 %v203
          %214 = vmatprep.subr.mxu0 0.0
          %215 = vmatpush1.msra.mxu0 %v204
          %216 = vmatprep.subr.mxu0 0.0
          %217 = vmatpush1.msra.mxu0 %v205
          %218 = vmatprep.subr.mxu0 0.0
          %219 = vmatpush1.msra.mxu0 0.0
          %220 = vmatprep.subr.mxu0 0.0
          %221 = vmatpush1.msra.mxu0 0.0
          %222 = vmatprep.subr.mxu0 0.0
          %223 = vmatpush1.msra.mxu0 0.0
          %224 = vmatprep.subr.mxu0 0.0
          %225 = vmatpush1.msra.mxu0 0.0
          %226 = vmatprep.subr.mxu0 0.0
          %227 = vmatpush1.msra.mxu0 0.0
          %228 = vmatprep.subr.mxu0 0.0
          %229 = vmatpush1.msra.mxu0 0.0
          %230 = vmatprep.subr.mxu0 0.0
          %231 = vmatpush1.msra.mxu0 0.0
          %232 = vmatprep.subr.mxu0 0.0
          %233 = vmatpush1.msra.mxu0 0.0
          %234 = vmatprep.subr.mxu0 0.0
          %235 = vmatpush1.msra.mxu0 0.0
          %236 = vmatprep.subr.mxu0 0.0
          %237 = vmatpush1.msra.mxu0 0.0
          %238 = vmatprep.subr.mxu0 0.0
          %239 = vmatpush1.msra.mxu0 0.0
          %240 = vmatprep.subr.mxu0 0.0
          %241 = vmatpush1.msra.mxu0 0.0
          %242 = vmatprep.subr.mxu0 0.0
          %243 = vmatpush1.msra.mxu0 0.0
          %244 = vmatprep.subr.mxu0 0.0
          %245 = vmatpush1.msra.mxu0 0.0
          %246 = vmatprep.subr.mxu0 0.0
          %247 = vmatpush1.msra.mxu0 0.0
          %248 = vmatprep.subr.mxu0 0.0
          %249 = vmatpush1.msra.mxu0 0.0
          %250 = vmatprep.subr.mxu0 0.0
          %251 = vmatpush1.msra.mxu0 0.0
          %252 = vmatprep.subr.mxu0 0.0
          %253 = vmatpush1.msra.mxu0 0.0
          %254 = vmatprep.subr.mxu0 0.0
          %255 = vmatpush1.msra.mxu0 0.0
          %256 = vmatprep.subr.mxu0 0.0
          %257 = vmatpush1.msra.mxu0 0.0
          %258 = vmatprep.subr.mxu0 0.0
          %259 = vmatpush1.msra.mxu0 0.0
          %260 = vmatprep.subr.mxu0 0.0
          %261 = vmatpush1.msra.mxu0 0.0
          %262 = vmatprep.subr.mxu0 0.0
          %263 = vmatpush1.msra.mxu0 0.0
          %264 = vmatprep.subr.mxu0 0.0
          %265 = vmatpush1.msra.mxu0 0.0
          %266 = vmatprep.subr.mxu0 0.0
          %267 = vmatpush1.msra.mxu0 0.0
          %268 = vmatprep.subr.mxu0 0.0
          %269 = vmatpush1.msra.mxu0 0.0
          %270 = vmatprep.subr.mxu0 0.0
          %271 = vmatpush1.msra.mxu0 0.0
          %272 = vmatprep.subr.mxu0 0.0
          %273 = vmatpush1.msra.mxu0 0.0
          %274 = vmatprep.mubr.f32.mxu0 0.0
          %275 = vmatmul.mubr.f32.gmra.mrb[0].mxu0 %v208
          %v276 = vpop.f32.mrb[0].mxu0
          %v277 = vadd.f32 0.0, %v276
          %v278 = vpop.f32.mrb[0].mxu0
          %279 = vdwg.mxu0
          %v280 = vmul.f32 %v277, 8.0
          %vm281 = vcmask 64512
          %282 = vst.msk [vmem:[#allocation2] sm:$0xff] %vm281, %v280
        $region36: #{tpu_custom_call.1} parent=31 // pred_fallthru
          _
        %v283 = vld [vmem:[#allocation2] sm:$0xff]
        %v284 = vld [vmem:[%s196] sm:$0xff]
        %vm285 = vcmask 64512
        %v287 = vsel %vm285, %v283, 0
        %289 = vmatprep.subr.mxu0 0.0
        %290 = vmatpush1.msra.mxu0 %v284
        %291 = vmatprep.subr.mxu0 0.0
        %292 = vmatpush1.msra.mxu0 0.0
        %293 = vmatprep.subr.mxu0 0.0
        %294 = vmatpush1.msra.mxu0 0.0
        %295 = vmatprep.subr.mxu0 0.0
        %296 = vmatpush1.msra.mxu0 0.0
        %297 = vmatprep.subr.mxu0 0.0
        %298 = vmatpush1.msra.mxu0 0.0
        %299 = vmatprep.subr.mxu0 0.0
        %300 = vmatpush1.msra.mxu0 0.0
        %301 = vmatprep.subr.mxu0 0.0
        %302 = vmatpush1.msra.mxu0 0.0
        %303 = vmatprep.subr.mxu0 0.0
        %304 = vmatpush1.msra.mxu0 0.0
        %305 = vmatprep.subr.mxu0 0.0
        %306 = vmatpush1.msra.mxu0 0.0
        %307 = vmatprep.subr.mxu0 0.0
        %308 = vmatpush1.msra.mxu0 0.0
        %309 = vmatprep.subr.mxu0 0.0
        %310 = vmatpush1.msra.mxu0 0.0
        %311 = vmatprep.subr.mxu0 0.0
        %312 = vmatpush1.msra.mxu0 0.0
        %313 = vmatprep.subr.mxu0 0.0
        %314 = vmatpush1.msra.mxu0 0.0
        %315 = vmatprep.subr.mxu0 0.0
        %316 = vmatpush1.msra.mxu0 0.0
        %317 = vmatprep.subr.mxu0 0.0
        %318 = vmatpush1.msra.mxu0 0.0
        %319 = vmatprep.subr.mxu0 0.0
        %320 = vmatpush1.msra.mxu0 0.0
        %321 = vmatprep.subr.mxu0 0.0
        %322 = vmatpush1.msra.mxu0 0.0
        %323 = vmatprep.subr.mxu0 0.0
        %324 = vmatpush1.msra.mxu0 0.0
        %325 = vmatprep.subr.mxu0 0.0
        %326 = vmatpush1.msra.mxu0 0.0
        %327 = vmatprep.subr.mxu0 0.0
        %328 = vmatpush1.msra.mxu0 0.0
        %329 = vmatprep.subr.mxu0 0.0
        %330 = vmatpush1.msra.mxu0 0.0
        %331 = vmatprep.subr.mxu0 0.0
        %332 = vmatpush1.msra.mxu0 0.0
        %333 = vmatprep.subr.mxu0 0.0
        %334 = vmatpush1.msra.mxu0 0.0
        %335 = vmatprep.subr.mxu0 0.0
        %336 = vmatpush1.msra.mxu0 0.0
        %337 = vmatprep.subr.mxu0 0.0
        %338 = vmatpush1.msra.mxu0 0.0
        %339 = vmatprep.subr.mxu0 0.0
        %340 = vmatpush1.msra.mxu0 0.0
        %341 = vmatprep.subr.mxu0 0.0
        %342 = vmatpush1.msra.mxu0 0.0
        %343 = vmatprep.subr.mxu0 0.0
        %344 = vmatpush1.msra.mxu0 0.0
        %345 = vmatprep.subr.mxu0 0.0
        %346 = vmatpush1.msra.mxu0 0.0
        %347 = vmatprep.subr.mxu0 0.0
        %348 = vmatpush1.msra.mxu0 0.0
        %349 = vmatprep.subr.mxu0 0.0
        %350 = vmatpush1.msra.mxu0 0.0
        %351 = vmatprep.subr.mxu0 0.0
        %352 = vmatpush1.msra.mxu0 0.0
        %353 = vmatprep.mubr.f32.mxu0 0.0
        %354 = vmatmul.mubr.f32.gmra.mrb[0].mxu0 %v287
        %v355 = vpop.f32.mrb[0].mxu0
        %v356 = vadd.f32 0.0, %v355
        %v357 = vpop.f32.mrb[0].mxu0
        %358 = vdwg.mxu0
        %vm359 = vcmask 523264
        %360 = vst.msk [vmem:[%s188] sm:$0xff] %vm359, %v356
        %s361 = sand.u32 %s112, 1
        %s362 = scalar_lea.sflag [#allocation4], %s361
        %s363 = sand.u32 %s112, 1
        %s364 = smul.addr %s363, 8
        %s365 = scalar_lea.vmem [#allocation3], %s364
        // Predicated region
        $region37: #{tpu_custom_call.1} parent=31 // pred_check
          %p366 = pneg %p122
        $region38: #{tpu_custom_call.1} parent=31 // pred_check_branch
          %368 = sbr.rel (%p366) target = $region40
        $region39: #{tpu_custom_call.1} parent=31 // pred_region
          %s370 = ssub.s32 128, 128
          %371 = vsyncadd %s362, %s370
          %s372 = sadd.s32 %s22, %s21
          %s373 = smul.addr %s372, 128
          %s374 = scalar_lea.hbm %s3, %s373
          %s376 = sshll.u32 %s365, 4
          %s377 = int_to_ptr.vmem [resolvable:$true] %s376
          %379 = dma.vmem_to_hbm [thread:$0]  %s377, 128, %s374, %s362
        $region40: #{tpu_custom_call.1} parent=31 // pred_fallthru
          _
      $region32: #{tpu_custom_call.1} parent=5 // pred_fallthru
        _
      %p380 = scmp.le.s32.totalorder 2, %s12
      // Predicated region
      $region41: #{tpu_custom_call.1} parent=5 // pred_check
        %p381 = pneg %p380
      $region42: #{tpu_custom_call.1} parent=5 // pred_check_branch
        %383 = sbr.rel (%p381) target = $region44
      $region43: #{tpu_custom_call.1} parent=5 // pred_region
        %s384 = ssub.s32 %s12, 2
        // Predicated region
        $region45: #{tpu_custom_call.1} parent=43 // pred_check
          %p385 = pneg %p128
        $region46: #{tpu_custom_call.1} parent=43 // pred_check_branch
          %387 = sbr.rel (%p385) target = $region48
        $region47: #{tpu_custom_call.1} parent=43 // pred_region
          %s388 = sand.u32 %s113, 1
          %s389 = scalar_lea.sflag [#allocation4], %s388
          %s390 = sand.u32 %s113, 1
          %s391 = smul.addr %s390, 8
          %s392 = scalar_lea.vmem [#allocation3], %s391
          %393 = dma.done %s389, 128
        $region48: #{tpu_custom_call.1} parent=43 // pred_fallthru
          _
      $region44: #{tpu_custom_call.1} parent=5 // pred_fallthru
        _
    $region6: #{tpu_custom_call.1} parent=1 // loop_footer
      %s16 = sadd.s32 1, %s12
    $region7: #{tpu_custom_call.1} parent=1 // loop_footer_branch
      %11 = sbr.rel target = $region3
    $region8: #{tpu_custom_call.1} parent=1 // loop_exit
      _
    %394 = vsyncpa [#allocation4], 1
    %s395 = scalar_lea.sflag [#allocation4], 1
    %396 = vsyncpa %s395, 1

</llo_original>
